<compile_context>
chip_gen: v5e
topology: v5e:2x2
jax: 0.10.0
libtpu: 0.0.40
codegen_flags: <defaults>
</compile_context>

<pallas_src>
import numpy as np
import jax
import jax.numpy as jnp
from jax.experimental import pallas as pl
from jax.experimental.pallas import tpu as pltpu


def _vmem_capacity_bytes():
    """Physical VMEM of the attached TPU; conservative 64 MiB (v7x per-core) fallback."""
    try:
        cap = int(pltpu.get_tpu_info().vmem_capacity_bytes)
        if cap > 0:
            return cap
    except Exception:
        pass
    return 64 << 20


def _est_vmem_bytes(kq, hidden, t_s, attn_itemsize):
    """Rough per-step VMEM usage (double-buffered pipelined blocks + scratch)."""
    bf16, f32, i32 = 2, 4, 4
    db = 2  # default double-buffering of every pipelined block
    q_in = db * kq * hidden * bf16                 # resident per-batch q (bf16)
    kt_in = db * hidden * t_s * bf16               # keys^T tile
    v_in = db * t_s * hidden * bf16                # values tile
    weights = db * (2 * hidden * hidden * bf16 + 2 * hidden * f32)   # Wk, Wv^T, bk, bv
    ctx_out = db * kq * hidden * f32               # resident ctx output block
    attn_out = db * kq * t_s * attn_itemsize       # attention column tile
    scratch = kq * hidden * f32 + kq * t_s * i32   # ctx accumulator + hoisted row iota
    return q_in + kt_in + v_in + weights + ctx_out + attn_out + scratch


def _pick_s_tile(S, kq, hidden, attn_itemsize, vmem_budget):
    """Largest 128-multiple divisor of S (256-aligned preferred) that fits the budget."""
    if S % 128 != 0:
        return S                      # small / odd S: full-extent block
    for t in (512, 256, 128):         # 384 dropped: keep MXU dims 256-aligned (v6e/v7x)
        if S % t == 0 and _est_vmem_bytes(kq, hidden, t, attn_itemsize) <= vmem_budget:
            return t
    return 128


def _attn_kernel(q_ref, kt_ref, v_ref,
                 wk_ref, bk_ref, wvt_ref, bv_ref,
                 ctx_ref, attn_ref,
                 ctx_acc, row_iota):
    """One grid step = (one batch element) x (one tS-wide column tile of scores/attn)."""
    s_idx = pl.program_id(1)
    n_s = pl.num_programs(1)

    kq = ctx_acc.shape[0]
    t_s = kt_ref.shape[2]

    # ---- once per batch: accumulator init + s-invariant row iota (hoisted).
    @pl.when(s_idx == 0)
    def _():
        ctx_acc[...] = jnp.zeros_like(ctx_acc)
        row_iota[...] = jax.lax.broadcasted_iota(jnp.int32, (kq, t_s), 0)

    # ---- per-tile K / V projections (bf16 MXU operands, f32 accumulation).
    # keys arrive pre-transposed, so Wk @ keys_t gives k^T (H, tS) with no XLU transpose.
    kt = (jnp.dot(wk_ref[...], kt_ref[0],
                  preferred_element_type=jnp.float32) + bk_ref[...])
    v = (jnp.dot(v_ref[0], wvt_ref[...],
                 preferred_element_type=jnp.float32) + bv_ref[...])

    # ---- scaled scores: q is already projected, scaled and bf16 (prepared in wrapper).
    scores = jnp.dot(q_ref[0], kt.astype(jnp.bfloat16),
                     preferred_element_type=jnp.float32)

    # ---- fused causal mask (torch.triu, diagonal included): global col >= row gets -1e7.
    col = jax.lax.broadcasted_iota(jnp.int32, (kq, t_s), 1) + s_idx * t_s
    masked = jnp.where(col >= row_iota[...], scores - jnp.float32(1e7), scores)

    # ---- softmax over the K axis (dim=1 of (B,K,S)); fully local to this column tile.
    m = jnp.max(masked, axis=0, keepdims=True)
    e = jnp.exp(masked - m)
    denom = jnp.sum(e, axis=0, keepdims=True)             # > 0 by construction
    attn = e * pl.reciprocal(denom, approx=True)          # divide on the EUP slot

    attn_ref[0] = attn.astype(attn_ref.dtype)

    # ---- context accumulation across column tiles (f32 accumulator, bf16 MXU operands).
    ctx_acc[...] += jnp.dot(attn.astype(jnp.bfloat16), v.astype(jnp.bfloat16),
                            preferred_element_type=jnp.float32)

    @pl.when(s_idx == n_s - 1)
    def _():
        ctx_ref[0] = ctx_acc[...].astype(ctx_ref.dtype)


def causal_scaled_dot_attention(queries, keys, values, params, *,
                                s_tile=None, attn_dtype=jnp.bfloat16):
    """params follow the PyTorch nn.Linear convention: W is (out, in), y = x @ W^T + b.

    Returns (context (B,K,H) in queries.dtype, attention_weights (B,K,S) in attn_dtype).
    """
    B, K, H = queries.shape
    _, S, _ = keys.shape
    out_dtype = queries.dtype
    attn_itemsize = jnp.dtype(attn_dtype).itemsize

    # Generation-aware tile sizing + scoped-VMEM request (v5e 128 MiB / v6e 128 / v7x 64).
    vmem_cap = _vmem_capacity_bytes()
    if s_tile is None:
        s_tile = _pick_s_tile(S, K, H, attn_itemsize, int(vmem_cap * 0.7))
    if S % s_tile != 0:
        raise ValueError(f"s_tile={s_tile} must divide S={S}")
    n_s = S // s_tile
    est = _est_vmem_bytes(K, H, s_tile, attn_itemsize)
    vmem_limit = int(min(vmem_cap - (8 << 20), max(2 * est, 32 << 20)))
    vmem_limit = max(vmem_limit, 16 << 20)

    # One-time layout / dtype / Q-projection prep in XLA (outside the grid loop):
    #   * scaled Q projection hoisted out of the kernel entirely (bf16 operands, f32 acc,
    #     bias add, * rsqrt(H), cast bf16) -> resident bf16 block, no Wq/bq in VMEM,
    #   * keys transposed to (B,H,S) so the kernel never transposes a tile,
    #   * all streamed activations pre-cast to bf16 (half the HBM->VMEM DMA bytes),
    #   * K/V weights pre-transposed where needed and cast to bf16; biases in f32.
    scale = float(H) ** -0.5
    q_scaled = (jnp.einsum("bkh,hd->bkd",
                           queries.astype(jnp.bfloat16),
                           params["Wq"].T.astype(jnp.bfloat16),
                           preferred_element_type=jnp.float32)
                + params["bq"].astype(jnp.float32))
    q_scaled = (q_scaled * scale).astype(jnp.bfloat16)
    keys_t = jnp.swapaxes(keys, 1, 2).astype(jnp.bfloat16)      # (B, H, S)
    values_b = values.astype(jnp.bfloat16)                      # (B, S, H)
    wk = params["Wk"].astype(jnp.bfloat16)                      # (H, H): used as Wk @ keys^T
    wv_t = params["Wv"].T.astype(jnp.bfloat16)                  # (H, H)
    bk = params["bk"].reshape(H, 1).astype(jnp.float32)
    bv = params["bv"].reshape(1, H).astype(jnp.float32)

    const = lambda b, s: (0, 0)   # weights/biases: constant block index -> fetched once

    fn = pl.pallas_call(
        _attn_kernel,
        out_shape=(
            jax.ShapeDtypeStruct((B, K, H), out_dtype),     # context
            jax.ShapeDtypeStruct((B, K, S), attn_dtype),    # attention_weights
        ),
        grid_spec=pltpu.PrefetchScalarGridSpec(
            num_scalar_prefetch=0,
            grid=(B, n_s),
            in_specs=[
                pl.BlockSpec((1, K, H), lambda b, s: (b, 0, 0)),        # q_scaled (per batch)
                pl.BlockSpec((1, H, s_tile), lambda b, s: (b, 0, s)),   # keys^T tile (bf16)
                pl.BlockSpec((1, s_tile, H), lambda b, s: (b, s, 0)),   # values tile (bf16)
                pl.BlockSpec((H, H), const),                            # Wk   (bf16)
                pl.BlockSpec((H, 1), const),                            # bk (column vector)
                pl.BlockSpec((H, H), const),                            # Wv^T (bf16)
                pl.BlockSpec((1, H), const),                            # bv
            ],
            out_specs=[
                pl.BlockSpec((1, K, H), lambda b, s: (b, 0, 0)),        # ctx: resident over s
                pl.BlockSpec((1, K, s_tile), lambda b, s: (b, 0, s)),   # attn column tile
            ],
            scratch_shapes=[
                pltpu.VMEM((K, H), jnp.float32),        # context accumulator
                pltpu.VMEM((K, s_tile), jnp.int32),     # hoisted row iota (s-invariant)
            ],
        ),
        compiler_params=pltpu.CompilerParams(
            dimension_semantics=("parallel", "arbitrary"),
            vmem_limit_bytes=vmem_limit),
    )
    return fn(q_scaled, keys_t, values_b, wk, bk, wv_t, bv)


def _reference(queries, keys, values, params, mxu_dtype=jnp.float32):
    """Pure-JAX mirror of the PyTorch forward.

    With mxu_dtype=float32 this is the exact f32 reference.  With bfloat16 it rounds the
    matmul operands at the same points as the Pallas kernel (accumulation stays f32).
    """
    f32 = jnp.float32
    H = queries.shape[-1]
    scale = float(H) ** -0.5
    q = jnp.einsum("bkh,hd->bkd", queries.astype(mxu_dtype),
                   params["Wq"].T.astype(mxu_dtype),
                   preferred_element_type=f32) + params["bq"].astype(f32)
    q = (q * scale).astype(mxu_dtype)
    kt = jnp.einsum("dh,bhs->bds", params["Wk"].astype(mxu_dtype),
                    jnp.swapaxes(keys, 1, 2).astype(mxu_dtype),
                    preferred_element_type=f32) + params["bk"].astype(f32)[None, :, None]
    v = jnp.einsum("bsh,hd->bsd", values.astype(mxu_dtype),
                   params["Wv"].T.astype(mxu_dtype),
                   preferred_element_type=f32) + params["bv"].astype(f32)
    scores = jnp.einsum("bkh,bhs->bks", q, kt.astype(mxu_dtype),
                        preferred_element_type=f32)
    K, S = scores.shape[1], scores.shape[2]
    mask = jnp.where(jnp.arange(S)[None, :] >= jnp.arange(K)[:, None],
                     f32(-1e7), f32(0.0))
    attn = jax.nn.softmax(scores + mask, axis=1)     # dim=1, exactly as in the module
    ctx = jnp.einsum("bks,bsh->bkh", attn.astype(mxu_dtype), v.astype(mxu_dtype),
                     preferred_element_type=f32).astype(queries.dtype)
    return ctx, attn


if __name__ == "__main__":
    B, SEQ, H = 2, 8, 32  # batch, seq_len (== k), hidden_size

    key = jax.random.PRNGKey(0)
    k_q, k_k, k_v, k_wq, k_bq, k_wk, k_bk, k_wv, k_bv = jax.random.split(key, 9)

    queries = jax.random.normal(k_q, (B, SEQ, H), dtype=jnp.float32)
    keys = jax.random.normal(k_k, (B, SEQ, H), dtype=jnp.float32)
    values = jax.random.normal(k_v, (B, SEQ, H), dtype=jnp.float32)

    # Deterministic Linear params (PyTorch convention: W (out, in), bias (out,)).
    bound = 1.0 / float(np.sqrt(H))
    params = {
        "Wq": jax.random.uniform(k_wq, (H, H), jnp.float32, -bound, bound),
        "bq": jax.random.uniform(k_bq, (H,), jnp.float32, -bound, bound),
        "Wk": jax.random.uniform(k_wk, (H, H), jnp.float32, -bound, bound),
        "bk": jax.random.uniform(k_bk, (H,), jnp.float32, -bound, bound),
        "Wv": jax.random.uniform(k_wv, (H, H), jnp.float32, -bound, bound),
        "bv": jax.random.uniform(k_bv, (H,), jnp.float32, -bound, bound),
    }

    ctx, attn = causal_scaled_dot_attention(queries, keys, values, params)
    jax.block_until_ready((ctx, attn))

    # Compare against a reference that rounds MXU operands to bf16 at the same points as
    # the kernel (f32 accumulation everywhere).  Tolerance covers the bf16 attention
    # output, bf16 operand rounding before the PV matmul, and the approx EUP reciprocal.
    ctx_ref, attn_ref = _reference(queries, keys, values, params, mxu_dtype=jnp.bfloat16)
    np.testing.assert_allclose(np.asarray(ctx, dtype=np.float32),
                               np.asarray(ctx_ref, dtype=np.float32),
                               rtol=2e-2, atol=2e-2)
    np.testing.assert_allclose(np.asarray(attn, dtype=np.float32),
                               np.asarray(attn_ref, dtype=np.float32),
                               rtol=2e-2, atol=2e-2)

    print("KERNEL_OK")
</pallas_src>

<mosaic_0001>
module attributes {stable_mosaic.version = 11 : i64} {
  func.func @_attn_kernel(%arg0: i32, %arg1: i32, %arg2: memref<1x8x32xbf16, #tpu.memory_space<vmem>>, %arg3: memref<1x32x8xbf16, #tpu.memory_space<vmem>>, %arg4: memref<1x8x32xbf16, #tpu.memory_space<vmem>>, %arg5: memref<32x32xbf16, #tpu.memory_space<vmem>>, %arg6: memref<32x1xf32, #tpu.memory_space<vmem>>, %arg7: memref<32x32xbf16, #tpu.memory_space<vmem>>, %arg8: memref<1x32xf32, #tpu.memory_space<vmem>>, %arg9: memref<1x8x32xf32, #tpu.memory_space<vmem>>, %arg10: memref<1x8x8xbf16, #tpu.memory_space<vmem>>, %arg11: memref<8x32xf32, #tpu.memory_space<vmem>>, %arg12: memref<8x8xi32, #tpu.memory_space<vmem>>) attributes {dimension_semantics = [#tpu.dimension_semantics<parallel>, #tpu.dimension_semantics<arbitrary>], iteration_bounds = array<i64: 2, 1>, scalar_prefetch = 0 : i64, scratch_operands = 2 : i64, tpu.core_type = #tpu.core_type<tc>, window_params = [{transform_indices = @transform_0, window_bounds = array<i64: 1, 8, 32>}, {transform_indices = @transform_1, window_bounds = array<i64: 1, 32, 8>}, {transform_indices = @transform_2, window_bounds = array<i64: 1, 8, 32>}, {pipeline_mode = #tpu.pipeline_mode<synchronous>, transform_indices = @transform_3, window_bounds = array<i64: 32, 32>}, {pipeline_mode = #tpu.pipeline_mode<synchronous>, transform_indices = @transform_4, window_bounds = array<i64: 32, 1>}, {pipeline_mode = #tpu.pipeline_mode<synchronous>, transform_indices = @transform_5, window_bounds = array<i64: 32, 32>}, {pipeline_mode = #tpu.pipeline_mode<synchronous>, transform_indices = @transform_6, window_bounds = array<i64: 1, 32>}, {transform_indices = @transform_7, window_bounds = array<i64: 1, 8, 32>}, {transform_indices = @transform_8, window_bounds = array<i64: 1, 8, 8>}]} {
    %c0_i32 = arith.constant 0 : i32
    %0 = arith.cmpi eq, %arg1, %c0_i32 : i32
    %1 = arith.extui %0 : i1 to i32
    %c0_i32_0 = arith.constant 0 : i32
    %2 = arith.cmpi ne, %1, %c0_i32_0 : i32
    scf.if %2 {
      %cst_34 = arith.constant 0.000000e+00 : f32
      %53 = vector.broadcast %cst_34 : f32 to vector<8x32xf32>
      %c0_35 = arith.constant 0 : index
      %c0_36 = arith.constant 0 : index
      %54 = vector.load %arg11[%c0_35, %c0_36] : memref<8x32xf32, #tpu.memory_space<vmem>>, vector<8x32xf32>
      tpu.vector_store %arg11[%c0_35, %c0_36], %53 {strides = array<i32>} : memref<8x32xf32, #tpu.memory_space<vmem>>, vector<8x32xf32>,
      %55 = tpu.iota {dimensions = array<i32: 0>} : vector<8x8xi32>
      %c0_37 = arith.constant 0 : index
      %c0_38 = arith.constant 0 : index
      %56 = vector.load %arg12[%c0_37, %c0_38] : memref<8x8xi32, #tpu.memory_space<vmem>>, vector<8x8xi32>
      tpu.vector_store %arg12[%c0_37, %c0_38], %55 {strides = array<i32>} : memref<8x8xi32, #tpu.memory_space<vmem>>, vector<8x8xi32>,
    } else {
    }
    %c0 = arith.constant 0 : index
    %c0_1 = arith.constant 0 : index
    %3 = vector.load %arg5[%c0, %c0_1] : memref<32x32xbf16, #tpu.memory_space<vmem>>, vector<32x32xbf16>
    %c0_2 = arith.constant 0 : index
    %c0_3 = arith.constant 0 : index
    %c0_4 = arith.constant 0 : index
    %4 = vector.load %arg3[%c0_2, %c0_3, %c0_4] : memref<1x32x8xbf16, #tpu.memory_space<vmem>>, vector<1x32x8xbf16>
    %5 = vector.shape_cast %4 : vector<1x32x8xbf16> to vector<32x8xbf16>
    %cst = arith.constant dense<0.000000e+00> : vector<32x8xf32>
    %6 = tpu.matmul %3, %5, %cst {dimension_numbers = #tpu.dot_dimension_numbers<[1], [0], [0], [1], [0, 0, 1, 1], [], []>} : vector<32x32xbf16>, vector<32x8xbf16>, vector<32x8xf32> -> vector<32x8xf32>
    %c0_5 = arith.constant 0 : index
    %c0_6 = arith.constant 0 : index
    %7 = vector.load %arg6[%c0_5, %c0_6] : memref<32x1xf32, #tpu.memory_space<vmem>>, vector<32x1xf32>
    %8 = vector.broadcast %7 : vector<32x1xf32> to vector<32x8xf32>
    %9 = arith.addf %6, %8 : vector<32x8xf32>
    %c0_7 = arith.constant 0 : index
    %c0_8 = arith.constant 0 : index
    %c0_9 = arith.constant 0 : index
    %10 = vector.load %arg4[%c0_7, %c0_8, %c0_9] : memref<1x8x32xbf16, #tpu.memory_space<vmem>>, vector<1x8x32xbf16>
    %11 = vector.shape_cast %10 : vector<1x8x32xbf16> to vector<8x32xbf16>
    %c0_10 = arith.constant 0 : index
    %c0_11 = arith.constant 0 : index
    %12 = vector.load %arg7[%c0_10, %c0_11] : memref<32x32xbf16, #tpu.memory_space<vmem>>, vector<32x32xbf16>
    %cst_12 = arith.constant dense<0.000000e+00> : vector<8x32xf32>
    %13 = tpu.matmul %11, %12, %cst_12 {dimension_numbers = #tpu.dot_dimension_numbers<[1], [0], [0], [1], [0, 0, 1, 1], [], []>} : vector<8x32xbf16>, vector<32x32xbf16>, vector<8x32xf32> -> vector<8x32xf32>
    %c0_13 = arith.constant 0 : index
    %c0_14 = arith.constant 0 : index
    %14 = vector.load %arg8[%c0_13, %c0_14] : memref<1x32xf32, #tpu.memory_space<vmem>>, vector<1x32xf32>
    %15 = vector.broadcast %14 : vector<1x32xf32> to vector<8x32xf32>
    %16 = arith.addf %13, %15 : vector<8x32xf32>
    %c0_15 = arith.constant 0 : index
    %c0_16 = arith.constant 0 : index
    %c0_17 = arith.constant 0 : index
    %17 = vector.load %arg2[%c0_15, %c0_16, %c0_17] : memref<1x8x32xbf16, #tpu.memory_space<vmem>>, vector<1x8x32xbf16>
    %18 = vector.shape_cast %17 : vector<1x8x32xbf16> to vector<8x32xbf16>
    %19 = arith.truncf %9 : vector<32x8xf32> to vector<32x8xbf16>
    %cst_18 = arith.constant dense<0.000000e+00> : vector<8x8xf32>
    %20 = tpu.matmul %18, %19, %cst_18 {dimension_numbers = #tpu.dot_dimension_numbers<[1], [0], [0], [1], [0, 0, 1, 1], [], []>} : vector<8x32xbf16>, vector<32x8xbf16>, vector<8x8xf32> -> vector<8x8xf32>
    %21 = tpu.iota {dimensions = array<i32: 1>} : vector<8x8xi32>
    %c8_i32 = arith.constant 8 : i32
    %22 = arith.muli %arg1, %c8_i32 : i32
    %23 = vector.broadcast %22 : i32 to vector<8x8xi32>
    %24 = arith.addi %21, %23 : vector<8x8xi32>
    %c0_19 = arith.constant 0 : index
    %c0_20 = arith.constant 0 : index
    %25 = vector.load %arg12[%c0_19, %c0_20] : memref<8x8xi32, #tpu.memory_space<vmem>>, vector<8x8xi32>
    %26 = arith.cmpi sge, %24, %25 : vector<8x8xi32>
    %cst_21 = arith.constant 1.000000e+07 : f32
    %27 = vector.broadcast %cst_21 : f32 to vector<8x8xf32>
    %28 = arith.subf %20, %27 : vector<8x8xf32>
    %29 = arith.select %26, %28, %20 : vector<8x8xi1>, vector<8x8xf32>
    %cst_22 = arith.constant dense<0xFF800000> : vector<8xf32>
    %30 = vector.multi_reduction <maximumf>, %29, %cst_22 [0] : vector<8x8xf32> to vector<8xf32>
    %31 = vector.shape_cast %30 : vector<8xf32> to vector<1x8xf32>
    %32 = vector.broadcast %31 : vector<1x8xf32> to vector<8x8xf32>
    %33 = arith.subf %29, %32 : vector<8x8xf32>
    %34 = math.exp %33 : vector<8x8xf32>
    %cst_23 = arith.constant dense<0.000000e+00> : vector<8xf32>
    %35 = vector.multi_reduction <add>, %34, %cst_23 [0] : vector<8x8xf32> to vector<8xf32>
    %36 = vector.shape_cast %35 : vector<8xf32> to vector<1x8xf32>
    %37 = tpu.reciprocal %36 {approx = true} : vector<1x8xf32> -> vector<1x8xf32>
    %38 = vector.broadcast %37 : vector<1x8xf32> to vector<8x8xf32>
    %39 = arith.mulf %34, %38 : vector<8x8xf32>
    %40 = arith.truncf %39 : vector<8x8xf32> to vector<8x8xbf16>
    %c0_24 = arith.constant 0 : index
    %c0_25 = arith.constant 0 : index
    %c0_26 = arith.constant 0 : index
    %41 = vector.load %arg10[%c0_24, %c0_25, %c0_26] : memref<1x8x8xbf16, #tpu.memory_space<vmem>>, vector<1x8x8xbf16>
    %42 = vector.shape_cast %41 : vector<1x8x8xbf16> to vector<8x8xbf16>
    %43 = vector.shape_cast %40 : vector<8x8xbf16> to vector<1x8x8xbf16>
    tpu.vector_store %arg10[%c0_24, %c0_25, %c0_26], %43 {strides = array<i32>} : memref<1x8x8xbf16, #tpu.memory_space<vmem>>, vector<1x8x8xbf16>,
    %c0_27 = arith.constant 0 : index
    %c0_28 = arith.constant 0 : index
    %44 = vector.load %arg11[%c0_27, %c0_28] : memref<8x32xf32, #tpu.memory_space<vmem>>, vector<8x32xf32>
    %45 = arith.truncf %39 : vector<8x8xf32> to vector<8x8xbf16>
    %46 = arith.truncf %16 : vector<8x32xf32> to vector<8x32xbf16>
    %cst_29 = arith.constant dense<0.000000e+00> : vector<8x32xf32>
    %47 = tpu.matmul %45, %46, %cst_29 {dimension_numbers = #tpu.dot_dimension_numbers<[1], [0], [0], [1], [0, 0, 1, 1], [], []>} : vector<8x8xbf16>, vector<8x32xbf16>, vector<8x32xf32> -> vector<8x32xf32>
    %48 = arith.addf %44, %47 : vector<8x32xf32>
    %c0_30 = arith.constant 0 : index
    %c0_31 = arith.constant 0 : index
    %49 = vector.load %arg11[%c0_30, %c0_31] : memref<8x32xf32, #tpu.memory_space<vmem>>, vector<8x32xf32>
    tpu.vector_store %arg11[%c0_30, %c0_31], %48 {strides = array<i32>} : memref<8x32xf32, #tpu.memory_space<vmem>>, vector<8x32xf32>,
    %c0_i32_32 = arith.constant 0 : i32
    %50 = arith.cmpi eq, %arg1, %c0_i32_32 : i32
    %51 = arith.extui %50 : i1 to i32
    %c0_i32_33 = arith.constant 0 : i32
    %52 = arith.cmpi ne, %51, %c0_i32_33 : i32
    scf.if %52 {
      %c0_34 = arith.constant 0 : index
      %c0_35 = arith.constant 0 : index
      %53 = vector.load %arg11[%c0_34, %c0_35] : memref<8x32xf32, #tpu.memory_space<vmem>>, vector<8x32xf32>
      %c0_36 = arith.constant 0 : index
      %c0_37 = arith.constant 0 : index
      %c0_38 = arith.constant 0 : index
      %54 = vector.load %arg9[%c0_36, %c0_37, %c0_38] : memref<1x8x32xf32, #tpu.memory_space<vmem>>, vector<1x8x32xf32>
      %55 = vector.shape_cast %54 : vector<1x8x32xf32> to vector<8x32xf32>
      %56 = vector.shape_cast %53 : vector<8x32xf32> to vector<1x8x32xf32>
      tpu.vector_store %arg9[%c0_36, %c0_37, %c0_38], %56 {strides = array<i32>} : memref<1x8x32xf32, #tpu.memory_space<vmem>>, vector<1x8x32xf32>,
    } else {
    }
    return
  }
  func.func @transform_0(%arg0: i32, %arg1: i32) -> (i32, i32, i32) {
    %c0_i32 = arith.constant 0 : i32
    %c0_i32_0 = arith.constant 0 : i32
    %c0_i32_1 = arith.constant 0 : i32
    return %arg0, %c0_i32, %c0_i32_0 : i32, i32, i32
  }
  func.func @transform_1(%arg0: i32, %arg1: i32) -> (i32, i32, i32) {
    %c0_i32 = arith.constant 0 : i32
    %c0_i32_0 = arith.constant 0 : i32
    return %arg0, %c0_i32, %arg1 : i32, i32, i32
  }
  func.func @transform_2(%arg0: i32, %arg1: i32) -> (i32, i32, i32) {
    %c0_i32 = arith.constant 0 : i32
    %c0_i32_0 = arith.constant 0 : i32
    return %arg0, %arg1, %c0_i32 : i32, i32, i32
  }
  func.func @transform_3(%arg0: i32, %arg1: i32) -> (i32, i32) {
    %c0_i32 = arith.constant 0 : i32
    %c0_i32_0 = arith.constant 0 : i32
    %c0_i32_1 = arith.constant 0 : i32
    return %c0_i32, %c0_i32_0 : i32, i32
  }
  func.func @transform_4(%arg0: i32, %arg1: i32) -> (i32, i32) {
    %c0_i32 = arith.constant 0 : i32
    %c0_i32_0 = arith.constant 0 : i32
    %c0_i32_1 = arith.constant 0 : i32
    return %c0_i32, %c0_i32_0 : i32, i32
  }
  func.func @transform_5(%arg0: i32, %arg1: i32) -> (i32, i32) {
    %c0_i32 = arith.constant 0 : i32
    %c0_i32_0 = arith.constant 0 : i32
    %c0_i32_1 = arith.constant 0 : i32
    return %c0_i32, %c0_i32_0 : i32, i32
  }
  func.func @transform_6(%arg0: i32, %arg1: i32) -> (i32, i32) {
    %c0_i32 = arith.constant 0 : i32
    %c0_i32_0 = arith.constant 0 : i32
    %c0_i32_1 = arith.constant 0 : i32
    return %c0_i32, %c0_i32_0 : i32, i32
  }
  func.func @transform_7(%arg0: i32, %arg1: i32) -> (i32, i32, i32) {
    %c0_i32 = arith.constant 0 : i32
    %c0_i32_0 = arith.constant 0 : i32
    %c0_i32_1 = arith.constant 0 : i32
    return %arg0, %c0_i32, %c0_i32_0 : i32, i32, i32
  }
  func.func @transform_8(%arg0: i32, %arg1: i32) -> (i32, i32, i32) {
    %c0_i32 = arith.constant 0 : i32
    %c0_i32_0 = arith.constant 0 : i32
    return %arg0, %c0_i32, %arg1 : i32, i32, i32
  }
}

</mosaic_0001>

<llo_original>
// kernel: tpu_custom_call.1
$region0: #{tpu_custom_call.1}
  #allocation0 [shape = 'u32[]', space=smem, size = 0x4, offset = 0x4, fixed_abs, tag = 'smem constant byte address 0x4 - core index']
  #allocation1 [shape = 'u32[72,128]{1,0:T(1,128)}', space=vmem, size = 0x9000, scoped, tag = 'internal scratch']
  #allocation2 [shape = 'f32[8,32]{1,0:T(8,128)}', space=vmem, size = 0x1000, scoped, tag = 'scratch operand']
  #allocation3 [shape = 's32[8,8]{1,0:T(8,128)}', space=vmem, size = 0x1000, scoped, tag = 'scratch operand']
  %s0 = inlined_call_operand.vmem [shape: bf16[2,8,32], index: 0, kind: input, shape index: {}]
  %s1 = inlined_call_operand.vmem [shape: bf16[2,32,8], index: 1, kind: input, shape index: {}]
  %s2 = inlined_call_operand.vmem [shape: bf16[2,8,32], index: 2, kind: input, shape index: {}]
  %s3 = inlined_call_operand.vmem [shape: bf16[32,32], index: 3, kind: input, shape index: {}]
  %s4 = inlined_call_operand.vmem [shape: f32[32,1], index: 4, kind: input, shape index: {}]
  %s5 = inlined_call_operand.vmem [shape: bf16[32,32], index: 5, kind: input, shape index: {}]
  %s6 = inlined_call_operand.vmem [shape: f32[1,32], index: 6, kind: input, shape index: {}]
  %s7 = inlined_call_operand.hbm [shape: f32[2,8,32], index: 7, kind: output, shape index: {0}]
  %s8 = inlined_call_operand.hbm [shape: bf16[2,8,8], index: 8, kind: output, shape index: {1}]
  %9 = xla_tuple %s7, %s8
  %s10 = sld [smem:[#allocation0]]
  $region77: #{tpu_custom_call.1} parent=0
    _
  %s12 = ssub.s32 1, %s10
  %s13 = scalar_select 0, %s12, %s10
  $region1: #{tpu_custom_call.1} parent=0
    #allocation4 [shape = 'u8[8192]{0}', space=vmem, size = 0x2000, scoped, tag = 'output window, operand 0']
    #allocation5 [shape = 's32[2]{0}', space=sflag, size = 0x8, scoped, tag = 'scoped memory for tpu_custom_call.1']
    #allocation6 [shape = 'u8[4096]{0}', space=vmem, size = 0x1000, scoped, tag = 'output window, operand 1']
    #allocation7 [shape = 's32[2]{0}', space=sflag, size = 0x8, scoped, tag = 'scoped memory for tpu_custom_call.1']
    %14 = vsyncpa [#allocation5], 0
    %s15 = scalar_lea.sflag [#allocation5], 1
    %16 = vsyncpa %s15, 0
    %17 = vsyncpa [#allocation7], 0
    %s18 = scalar_lea.sflag [#allocation7], 1
    %19 = vsyncpa %s18, 0
    loop: start=0, step=1, limit=4
    $region2: #{tpu_custom_call.1} parent=1 // loop_pre_header
      _
    $region3: #{tpu_custom_call.1} parent=1 // loop_header
      %s21 = sphi 0, %s25
      %p22 = scmp.ge.s32.totalorder %s21, 4
      %s28 = sphi 0, %s40
      %s29 = sphi 0, %s36
      %s30 = sphi 0, %s28
      %s31 = sphi 0, %s29
      %s32 = sphi 0, %s30
      %s33 = sphi 0, %s31
      %s43 = sphi 0, %s45
      %s46 = sphi 0, %s43
      %s47 = sphi 0, %s46
      %s63 = sphi 0, %s47
      %s71 = sphi 0, %s73
      %s74 = sphi 0, %s71
      %s75 = sphi 0, %s74
      %s91 = sphi 0, %s75
      %s99 = sphi 0, %s101
      %s102 = sphi 0, %s99
      %s103 = sphi 0, %s102
      %s119 = sphi 0, %s103
      %s123 = sphi 0, %s123
      %s125 = sphi 0, %s123
      %s126 = sphi 0, %s125
      %s140 = sphi 0, %s126
      %s144 = sphi 0, %s144
      %s146 = sphi 0, %s144
      %s147 = sphi 0, %s146
      %s161 = sphi 0, %s147
      %s165 = sphi 0, %s165
      %s167 = sphi 0, %s165
      %s168 = sphi 0, %s167
      %s182 = sphi 0, %s168
      %s186 = sphi 0, %s186
      %s188 = sphi 0, %s186
      %s189 = sphi 0, %s188
      %s203 = sphi 0, %s189
      %s209 = sphi 0, %s211
      %s212 = sphi 0, %s209
      %s213 = sphi 0, %s212
      %s229 = sphi 0, %s213
      %s237 = sphi 0, %s239
      %s240 = sphi 0, %s237
      %s241 = sphi 0, %s240
      %s257 = sphi 0, %s241
    $region4: #{tpu_custom_call.1} parent=1 // loop_header_branch
      %24 = sbr.rel (%p22) target = $region8
    $region5: #{tpu_custom_call.1} parent=1 // loop_body
      %s26 = ssub.s32 %s21, 1
      %s27 = ssub.s32 %s21, 2
      %s34 = sadd.s32 1, %s29
      %p35 = scmp.ge.s32.totalorder %s34, 1
      %s36 = scalar_select %p35, 0, %s34
      %s37 = sadd.s32 1, %s28
      %s38 = scalar_select %p35, %s37, %s28
      %p39 = scmp.ge.s32.totalorder %s38, 2
      %s40 = scalar_select %p39, 0, %s38
      %s41 = ssub.s32 %s28, %s40
      %p42 = scmp.eq.s32.totalorder %s41, 0
      %s44 = sadd.s32 %s43, 1
      %s45 = scalar_select %p42, %s43, %s44
      %p48 = pneg %p42
      %p49 = scmp.eq.s32.totalorder %s21, 1
      %p50 = por %p48, %p49
      %p51 = scmp.ne.s32.totalorder %s43, %s46
      %p52 = scmp.eq.s32.totalorder %s21, 0
      %p53 = por %p51, %p52
      %p54 = scmp.ne.s32.totalorder %s43, %s46
      %p55 = scmp.eq.s32.totalorder %s26, 1
      %p56 = por %p54, %p55
      %p57 = scmp.ne.s32.totalorder %s46, %s47
      %p58 = scmp.eq.s32.totalorder %s26, 0
      %p59 = por %p57, %p58
      %p60 = scmp.ne.s32.totalorder %s46, %s47
      %p61 = scmp.eq.s32.totalorder %s27, 1
      %p62 = por %p60, %p61
      %p64 = scmp.ne.s32.totalorder %s47, %s63
      %p65 = scmp.eq.s32.totalorder %s27, 0
      %p66 = por %p64, %p65
      %s67 = ssub.s32 %s28, %s40
      %s68 = ssub.s32 %s29, %s36
      %s69 = sor.u32 %s67, %s68
      %p70 = scmp.eq.s32.totalorder %s69, 0
      %s72 = sadd.s32 %s71, 1
      %s73 = scalar_select %p70, %s71, %s72
      %p76 = pneg %p70
      %p77 = scmp.eq.s32.totalorder %s21, 1
      %p78 = por %p76, %p77
      %p79 = scmp.ne.s32.totalorder %s71, %s74
      %p80 = scmp.eq.s32.totalorder %s21, 0
      %p81 = por %p79, %p80
      %p82 = scmp.ne.s32.totalorder %s71, %s74
      %p83 = scmp.eq.s32.totalorder %s26, 1
      %p84 = por %p82, %p83
      %p85 = scmp.ne.s32.totalorder %s74, %s75
      %p86 = scmp.eq.s32.totalorder %s26, 0
      %p87 = por %p85, %p86
      %p88 = scmp.ne.s32.totalorder %s74, %s75
      %p89 = scmp.eq.s32.totalorder %s27, 1
      %p90 = por %p88, %p89
      %p92 = scmp.ne.s32.totalorder %s75, %s91
      %p93 = scmp.eq.s32.totalorder %s27, 0
      %p94 = por %p92, %p93
      %s95 = ssub.s32 %s28, %s40
      %s96 = ssub.s32 %s29, %s36
      %s97 = sor.u32 %s95, %s96
      %p98 = scmp.eq.s32.totalorder %s97, 0
      %s100 = sadd.s32 %s99, 1
      %s101 = scalar_select %p98, %s99, %s100
      %p104 = pneg %p98
      %p105 = scmp.eq.s32.totalorder %s21, 1
      %p106 = por %p104, %p105
      %p107 = scmp.ne.s32.totalorder %s99, %s102
      %p108 = scmp.eq.s32.totalorder %s21, 0
      %p109 = por %p107, %p108
      %p110 = scmp.ne.s32.totalorder %s99, %s102
      %p111 = scmp.eq.s32.totalorder %s26, 1
      %p112 = por %p110, %p111
      %p113 = scmp.ne.s32.totalorder %s102, %s103
      %p114 = scmp.eq.s32.totalorder %s26, 0
      %p115 = por %p113, %p114
      %p116 = scmp.ne.s32.totalorder %s102, %s103
      %p117 = scmp.eq.s32.totalorder %s27, 1
      %p118 = por %p116, %p117
      %p120 = scmp.ne.s32.totalorder %s103, %s119
      %p121 = scmp.eq.s32.totalorder %s27, 0
      %p122 = por %p120, %p121
      %s124 = sadd.s32 %s123, 1
      %p127 = scmp.eq.s32.totalorder %s21, 1
      %p128 = scmp.ne.s32.totalorder %s123, %s125
      %p129 = scmp.eq.s32.totalorder %s21, 0
      %p130 = por %p128, %p129
      %p131 = scmp.ne.s32.totalorder %s123, %s125
      %p132 = scmp.eq.s32.totalorder %s26, 1
      %p133 = por %p131, %p132
      %p134 = scmp.ne.s32.totalorder %s125, %s126
      %p135 = scmp.eq.s32.totalorder %s26, 0
      %p136 = por %p134, %p135
      %p137 = scmp.ne.s32.totalorder %s125, %s126
      %p138 = scmp.eq.s32.totalorder %s27, 1
      %p139 = por %p137, %p138
      %p141 = scmp.ne.s32.totalorder %s126, %s140
      %p142 = scmp.eq.s32.totalorder %s27, 0
      %p143 = por %p141, %p142
      %s145 = sadd.s32 %s144, 1
      %p148 = scmp.eq.s32.totalorder %s21, 1
      %p149 = scmp.ne.s32.totalorder %s144, %s146
      %p150 = scmp.eq.s32.totalorder %s21, 0
      %p151 = por %p149, %p150
      %p152 = scmp.ne.s32.totalorder %s144, %s146
      %p153 = scmp.eq.s32.totalorder %s26, 1
      %p154 = por %p152, %p153
      %p155 = scmp.ne.s32.totalorder %s146, %s147
      %p156 = scmp.eq.s32.totalorder %s26, 0
      %p157 = por %p155, %p156
      %p158 = scmp.ne.s32.totalorder %s146, %s147
      %p159 = scmp.eq.s32.totalorder %s27, 1
      %p160 = por %p158, %p159
      %p162 = scmp.ne.s32.totalorder %s147, %s161
      %p163 = scmp.eq.s32.totalorder %s27, 0
      %p164 = por %p162, %p163
      %s166 = sadd.s32 %s165, 1
      %p169 = scmp.eq.s32.totalorder %s21, 1
      %p170 = scmp.ne.s32.totalorder %s165, %s167
      %p171 = scmp.eq.s32.totalorder %s21, 0
      %p172 = por %p170, %p171
      %p173 = scmp.ne.s32.totalorder %s165, %s167
      %p174 = scmp.eq.s32.totalorder %s26, 1
      %p175 = por %p173, %p174
      %p176 = scmp.ne.s32.totalorder %s167, %s168
      %p177 = scmp.eq.s32.totalorder %s26, 0
      %p178 = por %p176, %p177
      %p179 = scmp.ne.s32.totalorder %s167, %s168
      %p180 = scmp.eq.s32.totalorder %s27, 1
      %p181 = por %p179, %p180
      %p183 = scmp.ne.s32.totalorder %s168, %s182
      %p184 = scmp.eq.s32.totalorder %s27, 0
      %p185 = por %p183, %p184
      %s187 = sadd.s32 %s186, 1
      %p190 = scmp.eq.s32.totalorder %s21, 1
      %p191 = scmp.ne.s32.totalorder %s186, %s188
      %p192 = scmp.eq.s32.totalorder %s21, 0
      %p193 = por %p191, %p192
      %p194 = scmp.ne.s32.totalorder %s186, %s188
      %p195 = scmp.eq.s32.totalorder %s26, 1
      %p196 = por %p194, %p195
      %p197 = scmp.ne.s32.totalorder %s188, %s189
      %p198 = scmp.eq.s32.totalorder %s26, 0
      %p199 = por %p197, %p198
      %p200 = scmp.ne.s32.totalorder %s188, %s189
      %p201 = scmp.eq.s32.totalorder %s27, 1
      %p202 = por %p200, %p201
      %p204 = scmp.ne.s32.totalorder %s189, %s203
      %p205 = scmp.eq.s32.totalorder %s27, 0
      %p206 = por %p204, %p205
      %s207 = ssub.s32 %s28, %s40
      %p208 = scmp.eq.s32.totalorder %s207, 0
      %s210 = sadd.s32 %s209, 1
      %s211 = scalar_select %p208, %s209, %s210
      %p214 = pneg %p208
      %p215 = scmp.eq.s32.totalorder %s21, 1
      %p216 = por %p214, %p215
      %p217 = scmp.ne.s32.totalorder %s209, %s212
      %p218 = scmp.eq.s32.totalorder %s21, 0
      %p219 = por %p217, %p218
      %p220 = scmp.ne.s32.totalorder %s209, %s212
      %p221 = scmp.eq.s32.totalorder %s26, 1
      %p222 = por %p220, %p221
      %p223 = scmp.ne.s32.totalorder %s212, %s213
      %p224 = scmp.eq.s32.totalorder %s26, 0
      %p225 = por %p223, %p224
      %p226 = scmp.ne.s32.totalorder %s212, %s213
      %p227 = scmp.eq.s32.totalorder %s27, 1
      %p228 = por %p226, %p227
      %p230 = scmp.ne.s32.totalorder %s213, %s229
      %p231 = scmp.eq.s32.totalorder %s27, 0
      %p232 = por %p230, %p231
      %s233 = ssub.s32 %s28, %s40
      %s234 = ssub.s32 %s29, %s36
      %s235 = sor.u32 %s233, %s234
      %p236 = scmp.eq.s32.totalorder %s235, 0
      %s238 = sadd.s32 %s237, 1
      %s239 = scalar_select %p236, %s237, %s238
      %p242 = pneg %p236
      %p243 = scmp.eq.s32.totalorder %s21, 1
      %p244 = por %p242, %p243
      %p245 = scmp.ne.s32.totalorder %s237, %s240
      %p246 = scmp.eq.s32.totalorder %s21, 0
      %p247 = por %p245, %p246
      %p248 = scmp.ne.s32.totalorder %s237, %s240
      %p249 = scmp.eq.s32.totalorder %s26, 1
      %p250 = por %p248, %p249
      %p251 = scmp.ne.s32.totalorder %s240, %s241
      %p252 = scmp.eq.s32.totalorder %s26, 0
      %p253 = por %p251, %p252
      %p254 = scmp.ne.s32.totalorder %s240, %s241
      %p255 = scmp.eq.s32.totalorder %s27, 1
      %p256 = por %p254, %p255
      %p258 = scmp.ne.s32.totalorder %s241, %s257
      %p259 = scmp.eq.s32.totalorder %s27, 0
      %p260 = por %p258, %p259
      %p261 = scmp.le.s32.totalorder 1, %s21
      %p262 = scmp.lt.s32.totalorder %s21, 3
      %p263 = pnand %p261, %p262
      %p264 = pneg %p263
      // Predicated region
      $region9: #{tpu_custom_call.1} parent=5 // pred_check
        _
      $region10: #{tpu_custom_call.1} parent=5 // pred_check_branch
        %266 = sbr.rel (%p263) target = $region12
      $region11: #{tpu_custom_call.1} parent=5 // pred_region
        %s267 = ssub.s32 %s21, 1
        // Predicated region
        $region13: #{tpu_custom_call.1} parent=11 // pred_check
          %p268 = pneg %p136
        $region14: #{tpu_custom_call.1} parent=11 // pred_check_branch
          %270 = sbr.rel (%p268) target = $region16
        $region15: #{tpu_custom_call.1} parent=11 // pred_region
          _
        $region16: #{tpu_custom_call.1} parent=11 // pred_fallthru
          _
        // Predicated region
        $region17: #{tpu_custom_call.1} parent=11 // pred_check
          %p271 = pneg %p157
        $region18: #{tpu_custom_call.1} parent=11 // pred_check_branch
          %273 = sbr.rel (%p271) target = $region20
        $region19: #{tpu_custom_call.1} parent=11 // pred_region
          _
        $region20: #{tpu_custom_call.1} parent=11 // pred_fallthru
          _
        // Predicated region
        $region21: #{tpu_custom_call.1} parent=11 // pred_check
          %p274 = pneg %p178
        $region22: #{tpu_custom_call.1} parent=11 // pred_check_branch
          %276 = sbr.rel (%p274) target = $region24
        $region23: #{tpu_custom_call.1} parent=11 // pred_region
          _
        $region24: #{tpu_custom_call.1} parent=11 // pred_fallthru
          _
        // Predicated region
        $region25: #{tpu_custom_call.1} parent=11 // pred_check
          %p277 = pneg %p199
        $region26: #{tpu_custom_call.1} parent=11 // pred_check_branch
          %279 = sbr.rel (%p277) target = $region28
        $region27: #{tpu_custom_call.1} parent=11 // pred_region
          _
        $region28: #{tpu_custom_call.1} parent=11 // pred_fallthru
          _
      $region12: #{tpu_custom_call.1} parent=5 // pred_fallthru
        _
      %p280 = scmp.lt.s32.totalorder %s21, 2
      // Predicated region
      $region29: #{tpu_custom_call.1} parent=5 // pred_check
        %p281 = pneg %p280
      $region30: #{tpu_custom_call.1} parent=5 // pred_check_branch
        %283 = sbr.rel (%p281) target = $region32
      $region31: #{tpu_custom_call.1} parent=5 // pred_region
        // Predicated region
        $region33: #{tpu_custom_call.1} parent=31 // pred_check
          %p284 = pneg %p53
        $region34: #{tpu_custom_call.1} parent=31 // pred_check_branch
          %286 = sbr.rel (%p284) target = $region36
        $region35: #{tpu_custom_call.1} parent=31 // pred_region
          %p287 = scmp.lt.s32.totalorder %s28, 1
          %s288 = scalar_select %p287, %s28, 1
          %s289 = smul.addr %s288, 4
          %s290 = scalar_lea.vmem %s0, %s289
        $region36: #{tpu_custom_call.1} parent=31 // pred_fallthru
          _
        // Predicated region
        $region37: #{tpu_custom_call.1} parent=31 // pred_check
          %p291 = pneg %p81
        $region38: #{tpu_custom_call.1} parent=31 // pred_check_branch
          %293 = sbr.rel (%p291) target = $region40
        $region39: #{tpu_custom_call.1} parent=31 // pred_region
          %p294 = scmp.lt.s32.totalorder %s28, 1
          %s295 = scalar_select %p294, %s28, 1
          %p296 = scmp.lt.s32.totalorder %s29, 0
          %s297 = scalar_select %p296, %s29, 0
          %s298 = smul.addr %s295, 4
          %s299 = sadd.s32 %s297, %s298
          %s300 = smul.addr %s299, 4
          %s301 = scalar_lea.vmem %s1, %s300
        $region40: #{tpu_custom_call.1} parent=31 // pred_fallthru
          _
        // Predicated region
        $region41: #{tpu_custom_call.1} parent=31 // pred_check
          %p302 = pneg %p109
        $region42: #{tpu_custom_call.1} parent=31 // pred_check_branch
          %304 = sbr.rel (%p302) target = $region44
        $region43: #{tpu_custom_call.1} parent=31 // pred_region
          %p305 = scmp.lt.s32.totalorder %s28, 1
          %s306 = scalar_select %p305, %s28, 1
          %p307 = scmp.lt.s32.totalorder %s29, 0
          %s308 = scalar_select %p307, %s29, 0
          %s309 = sadd.s32 %s308, %s306
          %s310 = smul.addr %s309, 4
          %s311 = scalar_lea.vmem %s2, %s310
        $region44: #{tpu_custom_call.1} parent=31 // pred_fallthru
          _
      $region32: #{tpu_custom_call.1} parent=5 // pred_fallthru
        _
      %p312 = scmp.le.s32.totalorder 1, %s21
      %p313 = scmp.lt.s32.totalorder %s21, 3
      %p314 = pnand %p312, %p313
      %p315 = pneg %p314
      // Predicated region
      $region45: #{tpu_custom_call.1} parent=5 // pred_check
        _
      $region46: #{tpu_custom_call.1} parent=5 // pred_check_branch
        %317 = sbr.rel (%p314) target = $region48
      $region47: #{tpu_custom_call.1} parent=5 // pred_region
        %s318 = ssub.s32 %s21, 1
        %p319 = scmp.lt.s32.totalorder %s30, 1
        %s320 = scalar_select %p319, %s30, 1
        %s321 = smul.addr %s320, 4
        %s322 = scalar_lea.vmem %s0, %s321
        %p323 = pneg %p59
        %p324 = pneg %p56
        %p325 = scmp.lt.s32.totalorder %s30, 1
        %s326 = scalar_select %p325, %s30, 1
        %p327 = scmp.lt.s32.totalorder %s31, 0
        %s328 = scalar_select %p327, %s31, 0
        %s329 = smul.addr %s326, 4
        %s330 = sadd.s32 %s328, %s329
        %s331 = smul.addr %s330, 4
        %s332 = scalar_lea.vmem %s1, %s331
        %p333 = pneg %p87
        %p334 = pneg %p84
        %p335 = scmp.lt.s32.totalorder %s30, 1
        %s336 = scalar_select %p335, %s30, 1
        %p337 = scmp.lt.s32.totalorder %s31, 0
        %s338 = scalar_select %p337, %s31, 0
        %s339 = sadd.s32 %s338, %s336
        %s340 = smul.addr %s339, 4
        %s341 = scalar_lea.vmem %s2, %s340
        %p342 = pneg %p115
        %p343 = pneg %p112
        %p344 = pneg %p136
        %p345 = pneg %p133
        %p346 = pneg %p157
        %p347 = pneg %p154
        %p348 = pneg %p178
        %p349 = pneg %p175
        %p350 = pneg %p199
        %p351 = pneg %p196
        %p352 = pneg %p225
        %p353 = pneg %p222
        %s354 = sand.u32 %s212, 1
        %s355 = scalar_lea.sflag [#allocation5], %s354
        %s356 = sand.u32 %s212, 1
        %s357 = smul.addr %s356, 8
        %s358 = scalar_lea.vmem [#allocation4], %s357
        %p359 = pneg %p253
        %p360 = pneg %p250
        %s361 = sand.u32 %s240, 1
        %s362 = scalar_lea.sflag [#allocation7], %s361
        %s363 = sand.u32 %s240, 1
        %s364 = smul.addr %s363, 4
        %s365 = scalar_lea.vmem [#allocation6], %s364
        %p366 = scmp.lt.s32.totalorder %s30, 1
        %s367 = scalar_select %p366, %s30, 1
        %s368 = smul.addr %s367, 4
        %s369 = scalar_lea.vmem %s0, %s368
        %p370 = scmp.lt.s32.totalorder %s30, 1
        %s371 = scalar_select %p370, %s30, 1
        %p372 = scmp.lt.s32.totalorder %s31, 0
        %s373 = scalar_select %p372, %s31, 0
        %s374 = smul.addr %s371, 4
        %s375 = sadd.s32 %s373, %s374
        %s376 = smul.addr %s375, 4
        %s377 = scalar_lea.vmem %s1, %s376
        %p378 = scmp.lt.s32.totalorder %s30, 1
        %s379 = scalar_select %p378, %s30, 1
        %p380 = scmp.lt.s32.totalorder %s31, 0
        %s381 = scalar_select %p380, %s31, 0
        %s382 = sadd.s32 %s381, %s379
        %s383 = smul.addr %s382, 4
        %s384 = scalar_lea.vmem %s2, %s383
        %p386 = scmp.eq.s32.totalorder %s31, 0
        // Predicated region
        $region49: #{tpu_custom_call.1} parent=47 // pred_check
          %p387 = pneg %p386
        $region50: #{tpu_custom_call.1} parent=47 // pred_check_branch
          %389 = sbr.rel (%p387) target = $region52
        $region51: #{tpu_custom_call.1} parent=47 // pred_region
          %vm390 = vcmask 261120
          %391 = vst.msk [vmem:[#allocation2] sm:$0xff] %vm390, 0.0
          %v392 = vlaneseq
          %v393 = vshrl.u32 %v392, 7
          %vm394 = vcmask 64512
          %395 = vst.msk [vmem:[#allocation3] sm:$0xff] %vm394, %v393
        $region52: #{tpu_custom_call.1} parent=47 // pred_fallthru
          _
        %v396 = vld [vmem:[%s3] sm:$0xf]
        %v397 = vld [vmem:[%s3 + $0x4] sm:$0xf]
        %v398 = vld [vmem:[%s3 + $0x8] sm:$0xf]
        %v399 = vld [vmem:[%s3 + $0xc] sm:$0xf]
        %v400 = vld [vmem:[%s377] sm:$0xf]
        %v401 = vld [vmem:[%s377 + $0x4] sm:$0xf]
        %v402 = vld [vmem:[%s377 + $0x8] sm:$0xf]
        %v403 = vld [vmem:[%s377 + $0xc] sm:$0xf]
        %v404 = vld [vmem:[%s4] sm:$0xff]
        %v405 = vld [vmem:[%s4 + $0x8] sm:$0xff]
        %v406 = vld [vmem:[%s4 + $0x10] sm:$0xff]
        %v407 = vld [vmem:[%s4 + $0x18] sm:$0xff]
        %409 = vset.pattern.permute.xlu0 0
        %410 = vperm.xlu0 %409, %v404
        %v411 = vpop.permute.xlu0 %410
        %414 = vset.pattern.permute.xlu0 0
        %415 = vperm.xlu0 %414, %v405
        %v416 = vpop.permute.xlu0 %415
        %419 = vset.pattern.permute.xlu0 0
        %420 = vperm.xlu0 %419, %v406
        %v421 = vpop.permute.xlu0 %420
        %424 = vset.pattern.permute.xlu0 0
        %425 = vperm.xlu0 %424, %v407
        %v426 = vpop.permute.xlu0 %425
        %v432 = vunpack.c.l.b16 %v396
        %v433 = vunpack.c.l.b16 %v397
        %v434 = vunpack.c.l.b16 %v398
        %v435 = vunpack.c.l.b16 %v399
        %v436 = vpack.c.b16 %v433, %v432
        %v437 = vpack.c.b16 %v435, %v434
        %v442 = vunpack.c.l.b16 %v400
        %v443 = vunpack.c.l.b16 %v401
        %v444 = vunpack.c.l.b16 %v402
        %v445 = vunpack.c.l.b16 %v403
        %v446 = vpack.c.b16 %v443, %v442
        %v447 = vpack.c.b16 %v445, %v444
        %vm450 = vcmask 261120
        %v452 = vsel %vm450, %v436, 0
        %v455 = vsel %vm450, %v437, 0
        %457 = vmatpush.bf16.msra.mxu0 0
        %458 = vmatpush.bf16.msra.mxu0 0
        %459 = vmatpush.bf16.msra.mxu0 0
        %460 = vmatpush.bf16.msra.mxu0 0
        %461 = vmatpush.bf16.msra.mxu0 0
        %462 = vmatpush.bf16.msra.mxu0 0
        %463 = vmatpush.bf16.msra.mxu0 %v447
        %464 = vmatpush.bf16.msra.mxu0 %v446
        %465 = vmatmul.bf16.gmra.mxu0 %v452
        %v466 = vpop.f32.mrf.mxu0
        %v467 = vadd.f32 %v411, %v466
        %v468 = vpop.f32.mrf.mxu0
        %v469 = vadd.f32 %v416, %v468
        %470 = vmatmul.bf16.gmra.mxu0 %v455
        %v471 = vpop.f32.mrf.mxu0
        %v472 = vadd.f32 %v421, %v471
        %v473 = vpop.f32.mrf.mxu0
        %v474 = vadd.f32 %v426, %v473
        %475 = vdwg.mxu0
        %v476 = vld [vmem:[%s384] sm:$0xf]
        %v477 = vld [vmem:[%s5] sm:$0xf]
        %v478 = vld [vmem:[%s5 + $0x4] sm:$0xf]
        %v479 = vld [vmem:[%s5 + $0x8] sm:$0xf]
        %v480 = vld [vmem:[%s5 + $0xc] sm:$0xf]
        %v481 = vld [vmem:[%s6] sm:$0x1]
        %v483 = vperm.slane %v481, 0
        %v489 = vunpack.c.l.b16 %v477
        %v490 = vunpack.c.l.b16 %v478
        %v491 = vunpack.c.l.b16 %v479
        %v492 = vunpack.c.l.b16 %v480
        %v493 = vpack.c.b16 %v490, %v489
        %v494 = vpack.c.b16 %v492, %v491
        %v498 = vsel %vm450, %v476, 0
        %500 = vmatpush.bf16.msra.mxu0 0
        %501 = vmatpush.bf16.msra.mxu0 0
        %502 = vmatpush.bf16.msra.mxu0 0
        %503 = vmatpush.bf16.msra.mxu0 0
        %504 = vmatpush.bf16.msra.mxu0 0
        %505 = vmatpush.bf16.msra.mxu0 0
        %506 = vmatpush.bf16.msra.mxu0 %v494
        %507 = vmatpush.bf16.msra.mxu0 %v493
        %508 = vmatmul.bf16.gmra.mxu0 %v498
        %v509 = vpop.f32.mrf.mxu0
        %v510 = vadd.f32 %v483, %v509
        %v511 = vpop.f32.mrf.mxu0
        %512 = vdwg.mxu0
        %v513 = vld [vmem:[%s369] sm:$0xf]
        %v514 = vpack.c.bf16 %v469, %v467
        %v515 = vpack.c.bf16 %v474, %v472
        %v517 = vsel %vm450, %v513, 0
        %519 = vmatpush.bf16.msra.mxu0 0
        %520 = vmatpush.bf16.msra.mxu0 0
        %521 = vmatpush.bf16.msra.mxu0 0
        %522 = vmatpush.bf16.msra.mxu0 0
        %523 = vmatpush.bf16.msra.mxu0 0
        %524 = vmatpush.bf16.msra.mxu0 0
        %525 = vmatpush.bf16.msra.mxu0 %v515
        %526 = vmatpush.bf16.msra.mxu0 %v514
        %527 = vmatmul.bf16.gmra.mxu0 %v517
        %v528 = vpop.f32.mrf.mxu0
        %v529 = vadd.f32 0.0, %v528
        %v530 = vpop.f32.mrf.mxu0
        %531 = vdwg.mxu0
        %v532 = vlaneseq
        %v533 = vand.u32 %v532, 127
        %s534 = smul.u32 %s31, 8
        %v535 = vstv %s534
        %v536 = vadd.s32 %v533, %v535
        %v537 = vld [vmem:[#allocation3] sm:$0xff]
        %vm538 = vcmp.ge.s32.totalorder %v536, %v537
        %v539 = vsub.f32 %v529, 10000000.0
        %v540 = vsel %vm538, %v539, %v529
        %vm541 = vcmask 64512
        %v542 = vsel %vm541, %v540, -inf
        %v543 = vrot.slane %v542, 4
        %v544 = vmax.f32 %v542, %v543
        %v545 = vrot.slane %v544, 2
        %v546 = vmax.f32 %v544, %v545
        %v547 = vrot.slane %v546, 1
        %v548 = vmax.f32 %v546, %v547
        %v549 = vsub.f32 %v540, %v548
        %v550 = vmul.f32 %v549, 1.442695
        %v551 = vpow.pop %v550
        %v552 = vsel %vm541, %v551, 0.0
        %v553 = vrot.slane %v552, 4
        %v554 = vadd.f32 %v552, %v553
        %v555 = vrot.slane %v554, 2
        %v556 = vadd.f32 %v554, %v555
        %v557 = vrot.slane %v556, 1
        %v558 = vadd.f32 %v556, %v557
        %v559 = vrcp.pop %v558
        %v560 = vmul.f32 %v551, %v559
        %v561 = vpack.c.bf16 %v560, %v560
        %vm562 = vcmask 60416
        %563 = vst.msk [vmem:[%s365] sm:$0xf] %vm562, %v561
        %v564 = vld [vmem:[#allocation2] sm:$0xff]
        %v565 = vpack.c.bf16 %v510, %v510
        %v567 = vsel %vm541, %v561, 0
        %vm569 = vcmask 1043456
        %v571 = vsel %vm569, %v565, 0
        %573 = vmatpush.bf16.msra.mxu0 0
        %574 = vmatpush.bf16.msra.mxu0 0
        %575 = vmatpush.bf16.msra.mxu0 0
        %576 = vmatpush.bf16.msra.mxu0 0
        %577 = vmatpush.bf16.msra.mxu0 0
        %578 = vmatpush.bf16.msra.mxu0 0
        %579 = vmatpush.bf16.msra.mxu0 0
        %580 = vmatpush.bf16.msra.mxu0 %v571
        %581 = vmatmul.bf16.gmra.mxu0 %v567
        %v582 = vpop.f32.mrf.mxu0
        %v583 = vadd.f32 0.0, %v582
        %v584 = vpop.f32.mrf.mxu0
        %585 = vdwg.mxu0
        %v586 = vadd.f32 %v564, %v583
        %587 = vst.msk [vmem:[#allocation2] sm:$0xff] %vm450, %v586
        // Predicated region
        $region53: #{tpu_custom_call.1} parent=47 // pred_check
          %p588 = pneg %p386
        $region54: #{tpu_custom_call.1} parent=47 // pred_check_branch
          %590 = sbr.rel (%p588) target = $region56
        $region55: #{tpu_custom_call.1} parent=47 // pred_region
          %v591 = vld [vmem:[#allocation2] sm:$0xff]
          %592 = vst.msk [vmem:[%s358] sm:$0xff] %vm450, %v591
        $region56: #{tpu_custom_call.1} parent=47 // pred_fallthru
          _
        %s593 = sand.u32 %s212, 1
        %s594 = scalar_lea.sflag [#allocation5], %s593
        %s595 = sand.u32 %s212, 1
        %s596 = smul.addr %s595, 8
        %s597 = scalar_lea.vmem [#allocation4], %s596
        %s598 = sand.u32 %s240, 1
        %s599 = scalar_lea.sflag [#allocation7], %s598
        %s600 = sand.u32 %s240, 1
        %s601 = smul.addr %s600, 4
        %s602 = scalar_lea.vmem [#allocation6], %s601
        // Predicated region
        $region57: #{tpu_custom_call.1} parent=47 // pred_check
          %p603 = pneg %p222
        $region58: #{tpu_custom_call.1} parent=47 // pred_check_branch
          %605 = sbr.rel (%p603) target = $region60
        $region59: #{tpu_custom_call.1} parent=47 // pred_region
          %607 = vsyncadd %s594, 0
          %s608 = smul.addr %s30, 8
          %s609 = scalar_lea.hbm %s7, %s608
          %s611 = sshll.u32 %s597, 4
          %s612 = int_to_ptr.vmem [resolvable:$true] %s611
          %s613 = sshll.u32 %s609, 4
          %s614 = int_to_ptr.hbm [resolvable:$true] %s613
          %616 = dma.vmem_to_hbm [thread:$0]  %s612, 128, %s614, %s594
        $region60: #{tpu_custom_call.1} parent=47 // pred_fallthru
          _
        // Predicated region
        $region61: #{tpu_custom_call.1} parent=47 // pred_check
          %p617 = pneg %p250
        $region62: #{tpu_custom_call.1} parent=47 // pred_check_branch
          %619 = sbr.rel (%p617) target = $region64
        $region63: #{tpu_custom_call.1} parent=47 // pred_region
          %621 = vsyncadd %s599, 0
          %s622 = sadd.s32 %s31, %s30
          %s623 = smul.addr %s622, 4
          %s624 = scalar_lea.hbm %s8, %s623
          %s626 = sshll.u32 %s602, 4
          %s627 = int_to_ptr.vmem [resolvable:$true] %s626
          %s628 = sshll.u32 %s624, 4
          %s629 = int_to_ptr.hbm [resolvable:$true] %s628
          %631 = dma.vmem_to_hbm [thread:$0]  %s627, 64, %s629, %s599
        $region64: #{tpu_custom_call.1} parent=47 // pred_fallthru
          _
      $region48: #{tpu_custom_call.1} parent=5 // pred_fallthru
        _
      %p632 = scmp.le.s32.totalorder 2, %s21
      // Predicated region
      $region65: #{tpu_custom_call.1} parent=5 // pred_check
        %p633 = pneg %p632
      $region66: #{tpu_custom_call.1} parent=5 // pred_check_branch
        %635 = sbr.rel (%p633) target = $region68
      $region67: #{tpu_custom_call.1} parent=5 // pred_region
        %s636 = ssub.s32 %s21, 2
        // Predicated region
        $region69: #{tpu_custom_call.1} parent=67 // pred_check
          %p637 = pneg %p228
        $region70: #{tpu_custom_call.1} parent=67 // pred_check_branch
          %639 = sbr.rel (%p637) target = $region72
        $region71: #{tpu_custom_call.1} parent=67 // pred_region
          %s640 = sand.u32 %s213, 1
          %s641 = scalar_lea.sflag [#allocation5], %s640
          %s642 = sand.u32 %s213, 1
          %s643 = smul.addr %s642, 8
          %s644 = scalar_lea.vmem [#allocation4], %s643
          %646 = dma.done %s641, 128
        $region72: #{tpu_custom_call.1} parent=67 // pred_fallthru
          _
        // Predicated region
        $region73: #{tpu_custom_call.1} parent=67 // pred_check
          %p647 = pneg %p256
        $region74: #{tpu_custom_call.1} parent=67 // pred_check_branch
          %649 = sbr.rel (%p647) target = $region76
        $region75: #{tpu_custom_call.1} parent=67 // pred_region
          %s650 = sand.u32 %s241, 1
          %s651 = scalar_lea.sflag [#allocation7], %s650
          %s652 = sand.u32 %s241, 1
          %s653 = smul.addr %s652, 4
          %s654 = scalar_lea.vmem [#allocation6], %s653
          %656 = dma.done %s651, 64
        $region76: #{tpu_custom_call.1} parent=67 // pred_fallthru
          _
      $region68: #{tpu_custom_call.1} parent=5 // pred_fallthru
        _
    $region6: #{tpu_custom_call.1} parent=1 // loop_footer
      %s25 = sadd.s32 1, %s21
    $region7: #{tpu_custom_call.1} parent=1 // loop_footer_branch
      %20 = sbr.rel target = $region3
    $region8: #{tpu_custom_call.1} parent=1 // loop_exit
      _
    %657 = vsyncpa [#allocation5], 1
    %s658 = scalar_lea.sflag [#allocation5], 1
    %659 = vsyncpa %s658, 1
    %660 = vsyncpa [#allocation7], 1
    %s661 = scalar_lea.sflag [#allocation7], 1
    %662 = vsyncpa %s661, 1

</llo_original>
